<compile_context>
chip_gen: v5e
topology: v5e:2x2
jax: 0.10.0
libtpu: 0.0.40
codegen_flags: <defaults>
</compile_context>

<pallas_src>
import functools

import jax
import jax.numpy as jnp
from jax.experimental import pallas as pl
from jax.experimental.pallas import tpu as pltpu


_NEG_BIG = -1.0e30


def _round_up(x, m):
    return (x + m - 1) // m * m


def _sum_kernel(im_ref, s_ref, dc_ref, dr_ref, rowsum_ref, *,
                margin, batch, tm, tn, mask_pad):
    """Non-max_violation path: per-row partial sums of both hinge terms."""
    i = pl.program_id(0)
    j = pl.program_id(1)

    @pl.when(j == 0)
    def _():
        rowsum_ref[...] = jnp.zeros_like(rowsum_ref)

    # scores[r, c] = <im_r, s_c>; contract both operands on the last dim (no s.T /
    # XLU transpose before the MXU push), accumulate in f32.
    scores = jax.lax.dot_general(
        im_ref[...], s_ref[...],
        dimension_numbers=(((1,), (1,)), ((), ())),
        preferred_element_type=jnp.float32,
    )  # (tm, tn) f32

    if mask_pad:
        rows = i * tm + jax.lax.broadcasted_iota(jnp.int32, (tm, 1), 0)
        cols = j * tn + jax.lax.broadcasted_iota(jnp.int32, (1, tn), 1)
        valid = (rows < batch) & (cols < batch)        # (tm, tn) via broadcast
        scores = jnp.where(valid, scores, _NEG_BIG)    # hinge of -1e30 is 0

    d1 = dc_ref[...]   # (tm, 1)  diag for this row tile
    d2 = dr_ref[...]   # (1, tn)  diag for this col tile
    cost = (jnp.maximum(margin + scores - d1, 0.0) +
            jnp.maximum(margin + scores - d2, 0.0))
    rowsum_ref[...] += jnp.sum(cost, axis=1, keepdims=True)


def _max_kernel(im_ref, s_ref, rowmax_ref, colmax_ref, *,
                batch, tm, tn, mask_pad):
    """max_violation path: running row maxima + per-tile column maxima of the
    masked score matrix (the hinge is applied to the O(B) maxima in the wrapper,
    since max commutes with the monotone relu(margin + x - diag))."""
    i = pl.program_id(0)
    j = pl.program_id(1)

    scores = jax.lax.dot_general(
        im_ref[...], s_ref[...],
        dimension_numbers=(((1,), (1,)), ((), ())),
        preferred_element_type=jnp.float32,
    )  # (tm, tn) f32

    rows = i * tm + jax.lax.broadcasted_iota(jnp.int32, (tm, 1), 0)
    cols = j * tn + jax.lax.broadcasted_iota(jnp.int32, (1, tn), 1)
    valid = rows != cols
    if mask_pad:
        valid = valid & (rows < batch) & (cols < batch)
    scores = jnp.where(valid, scores, _NEG_BIG)        # single pre-relu mask

    # Row maxima carried across j in the resident output block.
    tile_rowmax = jnp.max(scores, axis=1, keepdims=True)   # (tm, 1)

    @pl.when(j == 0)
    def _():
        rowmax_ref[...] = jnp.full(rowmax_ref.shape, _NEG_BIG, jnp.float32)

    rowmax_ref[...] = jnp.maximum(rowmax_ref[...], tile_rowmax)

    # Per-(i, j) tile column maxima; max-reduced over i in the wrapper (O(ni*Bp)).
    colmax_ref[...] = jnp.max(scores, axis=0, keepdims=True).reshape(1, 1, tn)


def contrastive_loss(im, s, *, margin=0.0, max_violation=False):
    """Pallas implementation of ContrastiveLoss.forward (measure='cosine')."""
    assert im.ndim == 2 and s.ndim == 2 and im.shape == s.shape
    batch, dim = im.shape
    itemsize = jnp.dtype(im.dtype).itemsize
    margin = float(margin)

    # Lane-dense padding: D -> multiple of 128 lanes; B -> multiple of 128 so the
    # (tm, tn) score tiles and the MXU N dimension are full (no masked vregs).
    d_pad = _round_up(dim, 128)
    b_pad = _round_up(batch, 128)

    def _tile_bytes(t):
        # double-buffered im/s tiles + score/cost tile temporaries
        return 2 * 2 * t * d_pad * itemsize + 8 * t * t * 4

    tm = 256 if (b_pad % 256 == 0 and _tile_bytes(256) <= 40 * 1024 * 1024) else 128
    tn = tm
    ni, nj = b_pad // tm, b_pad // tn

    if (b_pad, d_pad) != (batch, dim):
        pad = ((0, b_pad - batch), (0, d_pad - dim))
        im_p = jnp.pad(im, pad)
        s_p = jnp.pad(s, pad)
    else:
        im_p, s_p = im, s
    mask_pad = batch != b_pad

    # diag[i] = <im_i, s_i>: cheap O(B*D) VPU work, done once outside the grid.
    diag = jnp.sum(im_p.astype(jnp.float32) * s_p.astype(jnp.float32), axis=1)

    compiler_params = pltpu.CompilerParams(
        dimension_semantics=("parallel", "arbitrary"),
        vmem_limit_bytes=int(min(max(2 * _tile_bytes(tm), 32 * 1024 * 1024),
                                 64 * 1024 * 1024)),
    )
    cost_estimate = pl.CostEstimate(
        flops=2 * b_pad * b_pad * d_pad,
        transcendentals=0,
        bytes_accessed=(1 + ni) * b_pad * d_pad * itemsize
        + 8 * b_pad + 4 * ni * b_pad,
    )

    im_spec = pl.BlockSpec((tm, d_pad), lambda i, j: (i, 0))   # resident across j
    s_spec = pl.BlockSpec((tn, d_pad), lambda i, j: (j, 0))    # streamed along j

    if max_violation:
        kernel = functools.partial(_max_kernel, batch=batch, tm=tm, tn=tn,
                                   mask_pad=mask_pad)
        rowmax, colmax_tiles = pl.pallas_call(
            kernel,
            grid=(ni, nj),
            in_specs=[im_spec, s_spec],
            out_specs=(
                pl.BlockSpec((tm, 1), lambda i, j: (i, 0)),
                pl.BlockSpec((1, 1, tn), lambda i, j: (i, 0, j)),
            ),
            out_shape=(
                jax.ShapeDtypeStruct((b_pad, 1), jnp.float32),
                jax.ShapeDtypeStruct((ni, 1, b_pad), jnp.float32),
            ),
            compiler_params=compiler_params,
            cost_estimate=cost_estimate,
        )(im_p, s_p)
        # Padded rows/cols carry -1e30 maxima and 0 diag, so they contribute 0.
        colmax = jnp.max(colmax_tiles[:, 0, :], axis=0)        # (b_pad,)
        loss_s = jnp.sum(jnp.maximum(margin + rowmax[:, 0] - diag, 0.0))
        loss_im = jnp.sum(jnp.maximum(margin + colmax - diag, 0.0))
        return loss_s + loss_im

    kernel = functools.partial(_sum_kernel, margin=margin, batch=batch, tm=tm,
                               tn=tn, mask_pad=mask_pad)
    rowsum = pl.pallas_call(
        kernel,
        grid=(ni, nj),
        in_specs=[
            im_spec,
            s_spec,
            pl.BlockSpec((tm, 1), lambda i, j: (i, 0)),
            pl.BlockSpec((1, tn), lambda i, j: (0, j)),
        ],
        out_specs=pl.BlockSpec((tm, 1), lambda i, j: (i, 0)),
        out_shape=jax.ShapeDtypeStruct((b_pad, 1), jnp.float32),
        compiler_params=compiler_params,
        cost_estimate=cost_estimate,
    )(im_p, s_p, diag.reshape(b_pad, 1), diag.reshape(1, b_pad))
    # The unmasked diagonal contributes exactly max(margin, 0) per real row for
    # each of the two hinge terms (up to MXU-vs-VPU rounding of scores[i,i]-diag[i]).
    return jnp.sum(rowsum) - 2.0 * batch * max(margin, 0.0)


def _reference_loss(im, s, margin=0.0, max_violation=False):
    scores = im @ s.T
    diag = jnp.diag(scores)[:, None]
    cost_s = jnp.maximum(margin + scores - diag, 0.0)
    cost_im = jnp.maximum(margin + scores - diag.T, 0.0)
    eye = jnp.eye(scores.shape[0], dtype=bool)
    cost_s = jnp.where(eye, 0.0, cost_s)
    cost_im = jnp.where(eye, 0.0, cost_im)
    if max_violation:
        return jnp.sum(jnp.max(cost_s, axis=1)) + jnp.sum(jnp.max(cost_im, axis=0))
    return jnp.sum(cost_s) + jnp.sum(cost_im)


# TODO(synk): the 'order' similarity measure (order_sim) of the original module is
# not implemented; only the default cosine_sim path is covered.

if __name__ == "__main__":
    key = jax.random.PRNGKey(0)
    k1, k2, k3, k4, k5, k6 = jax.random.split(key, 6)

    # Case 1: default module config (margin=0, sum of violations), padded batch.
    im = jax.random.normal(k1, (8, 32), dtype=jnp.float32)
    s = jax.random.normal(k2, (8, 32), dtype=jnp.float32)
    loss = jax.block_until_ready(contrastive_loss(im, s, margin=0.0, max_violation=False))
    ref = _reference_loss(im, s, margin=0.0, max_violation=False)
    assert jnp.allclose(loss, ref, rtol=1e-5, atol=1e-3), (loss, ref)

    # Case 2: margin > 0 + max_violation, shapes that exercise row/col padding.
    im2 = jax.random.normal(k3, (6, 48), dtype=jnp.float32)
    s2 = jax.random.normal(k4, (6, 48), dtype=jnp.float32)
    loss2 = jax.block_until_ready(contrastive_loss(im2, s2, margin=0.2, max_violation=True))
    ref2 = _reference_loss(im2, s2, margin=0.2, max_violation=True)
    assert jnp.allclose(loss2, ref2, rtol=1e-5, atol=1e-3), (loss2, ref2)

    # Case 3: batch already a multiple of 128 -> mask-free sum path with the
    # analytic diagonal correction.
    im3 = jax.random.normal(k5, (128, 32), dtype=jnp.float32)
    s3 = jax.random.normal(k6, (128, 32), dtype=jnp.float32)
    loss3 = jax.block_until_ready(contrastive_loss(im3, s3, margin=0.1, max_violation=False))
    ref3 = _reference_loss(im3, s3, margin=0.1, max_violation=False)
    assert jnp.allclose(loss3, ref3, rtol=1e-5, atol=1e-2), (loss3, ref3)

    print("KERNEL_OK")
</pallas_src>

<mosaic_0001>
module attributes {stable_mosaic.version = 11 : i64} {
  func.func @_sum_kernel(%arg0: i32, %arg1: i32, %arg2: memref<128x128xf32, #tpu.memory_space<vmem>>, %arg3: memref<128x128xf32, #tpu.memory_space<vmem>>, %arg4: memref<128x1xf32, #tpu.memory_space<vmem>>, %arg5: memref<1x128xf32, #tpu.memory_space<vmem>>, %arg6: memref<128x1xf32, #tpu.memory_space<vmem>>) attributes {dimension_semantics = [#tpu.dimension_semantics<parallel>, #tpu.dimension_semantics<arbitrary>], iteration_bounds = array<i64: 1, 1>, scalar_prefetch = 0 : i64, scratch_operands = 0 : i64, tpu.core_type = #tpu.core_type<tc>, window_params = [{transform_indices = @transform_0, window_bounds = array<i64: 128, 128>}, {transform_indices = @transform_1, window_bounds = array<i64: 128, 128>}, {transform_indices = @transform_2, window_bounds = array<i64: 128, 1>}, {transform_indices = @transform_3, window_bounds = array<i64: 1, 128>}, {transform_indices = @transform_4, window_bounds = array<i64: 128, 1>}]} {
    %c0_i32 = arith.constant 0 : i32
    %0 = arith.cmpi eq, %arg1, %c0_i32 : i32
    %1 = arith.extui %0 : i1 to i32
    %c0_i32_0 = arith.constant 0 : i32
    %2 = arith.cmpi ne, %1, %c0_i32_0 : i32
    scf.if %2 {
      %cst_20 = arith.constant 0.000000e+00 : f32
      %43 = vector.broadcast %cst_20 : f32 to vector<128x1xf32>
      %c0_21 = arith.constant 0 : index
      %c0_22 = arith.constant 0 : index
      %44 = vector.load %arg6[%c0_21, %c0_22] : memref<128x1xf32, #tpu.memory_space<vmem>>, vector<128x1xf32>
      tpu.vector_store %arg6[%c0_21, %c0_22], %43 {strides = array<i32>} : memref<128x1xf32, #tpu.memory_space<vmem>>, vector<128x1xf32>,
    } else {
    }
    %c0 = arith.constant 0 : index
    %c0_1 = arith.constant 0 : index
    %3 = vector.load %arg2[%c0, %c0_1] : memref<128x128xf32, #tpu.memory_space<vmem>>, vector<128x128xf32>
    %c0_2 = arith.constant 0 : index
    %c0_3 = arith.constant 0 : index
    %4 = vector.load %arg3[%c0_2, %c0_3] : memref<128x128xf32, #tpu.memory_space<vmem>>, vector<128x128xf32>
    %cst = arith.constant dense<0.000000e+00> : vector<128x128xf32>
    %5 = tpu.matmul %3, %4, %cst {dimension_numbers = #tpu.dot_dimension_numbers<[1], [1], [0], [0], [0, 0, 1, 0], [], []>} : vector<128x128xf32>, vector<128x128xf32>, vector<128x128xf32> -> vector<128x128xf32>
    %c128_i32 = arith.constant 128 : i32
    %6 = arith.muli %arg0, %c128_i32 : i32
    %7 = tpu.iota {dimensions = array<i32: 0>} : vector<128x1xi32>
    %8 = vector.broadcast %6 : i32 to vector<128x1xi32>
    %9 = arith.addi %8, %7 : vector<128x1xi32>
    %c128_i32_4 = arith.constant 128 : i32
    %10 = arith.muli %arg1, %c128_i32_4 : i32
    %11 = tpu.iota {dimensions = array<i32: 1>} : vector<1x128xi32>
    %12 = vector.broadcast %10 : i32 to vector<1x128xi32>
    %13 = arith.addi %12, %11 : vector<1x128xi32>
    %c8_i32 = arith.constant 8 : i32
    %14 = vector.broadcast %c8_i32 : i32 to vector<128x1xi32>
    %15 = arith.cmpi slt, %9, %14 : vector<128x1xi32>
    %c8_i32_5 = arith.constant 8 : i32
    %16 = vector.broadcast %c8_i32_5 : i32 to vector<1x128xi32>
    %17 = arith.cmpi slt, %13, %16 : vector<1x128xi32>
    %18 = vector.broadcast %15 : vector<128x1xi1> to vector<128x128xi1>
    %19 = vector.broadcast %17 : vector<1x128xi1> to vector<128x128xi1>
    %20 = arith.andi %18, %19 : vector<128x128xi1>
    %cst_6 = arith.constant -1.000000e+30 : f32
    %21 = vector.broadcast %cst_6 : f32 to vector<128x128xf32>
    %22 = arith.select %20, %5, %21 : vector<128x128xi1>, vector<128x128xf32>
    %c0_7 = arith.constant 0 : index
    %c0_8 = arith.constant 0 : index
    %23 = vector.load %arg4[%c0_7, %c0_8] : memref<128x1xf32, #tpu.memory_space<vmem>>, vector<128x1xf32>
    %c0_9 = arith.constant 0 : index
    %c0_10 = arith.constant 0 : index
    %24 = vector.load %arg5[%c0_9, %c0_10] : memref<1x128xf32, #tpu.memory_space<vmem>>, vector<1x128xf32>
    %cst_11 = arith.constant 0.000000e+00 : f32
    %25 = vector.broadcast %cst_11 : f32 to vector<128x128xf32>
    %26 = arith.addf %25, %22 : vector<128x128xf32>
    %27 = vector.broadcast %23 : vector<128x1xf32> to vector<128x128xf32>
    %28 = arith.subf %26, %27 : vector<128x128xf32>
    %cst_12 = arith.constant 0.000000e+00 : f32
    %29 = vector.broadcast %cst_12 : f32 to vector<128x128xf32>
    %30 = arith.maximumf %28, %29 : vector<128x128xf32>
    %cst_13 = arith.constant 0.000000e+00 : f32
    %31 = vector.broadcast %cst_13 : f32 to vector<128x128xf32>
    %32 = arith.addf %31, %22 : vector<128x128xf32>
    %33 = vector.broadcast %24 : vector<1x128xf32> to vector<128x128xf32>
    %34 = arith.subf %32, %33 : vector<128x128xf32>
    %cst_14 = arith.constant 0.000000e+00 : f32
    %35 = vector.broadcast %cst_14 : f32 to vector<128x128xf32>
    %36 = arith.maximumf %34, %35 : vector<128x128xf32>
    %37 = arith.addf %30, %36 : vector<128x128xf32>
    %c0_15 = arith.constant 0 : index
    %c0_16 = arith.constant 0 : index
    %38 = vector.load %arg6[%c0_15, %c0_16] : memref<128x1xf32, #tpu.memory_space<vmem>>, vector<128x1xf32>
    %cst_17 = arith.constant dense<0.000000e+00> : vector<128xf32>
    %39 = vector.multi_reduction <add>, %37, %cst_17 [1] : vector<128x128xf32> to vector<128xf32>
    %40 = vector.shape_cast %39 : vector<128xf32> to vector<128x1xf32>
    %41 = arith.addf %38, %40 : vector<128x1xf32>
    %c0_18 = arith.constant 0 : index
    %c0_19 = arith.constant 0 : index
    %42 = vector.load %arg6[%c0_18, %c0_19] : memref<128x1xf32, #tpu.memory_space<vmem>>, vector<128x1xf32>
    tpu.vector_store %arg6[%c0_18, %c0_19], %41 {strides = array<i32>} : memref<128x1xf32, #tpu.memory_space<vmem>>, vector<128x1xf32>,
    return
  }
  func.func @transform_0(%arg0: i32, %arg1: i32) -> (i32, i32) {
    %c0_i32 = arith.constant 0 : i32
    %c0_i32_0 = arith.constant 0 : i32
    return %arg0, %c0_i32 : i32, i32
  }
  func.func @transform_1(%arg0: i32, %arg1: i32) -> (i32, i32) {
    %c0_i32 = arith.constant 0 : i32
    %c0_i32_0 = arith.constant 0 : i32
    return %arg1, %c0_i32 : i32, i32
  }
  func.func @transform_2(%arg0: i32, %arg1: i32) -> (i32, i32) {
    %c0_i32 = arith.constant 0 : i32
    %c0_i32_0 = arith.constant 0 : i32
    return %arg0, %c0_i32 : i32, i32
  }
  func.func @transform_3(%arg0: i32, %arg1: i32) -> (i32, i32) {
    %c0_i32 = arith.constant 0 : i32
    %c0_i32_0 = arith.constant 0 : i32
    return %c0_i32, %arg1 : i32, i32
  }
  func.func @transform_4(%arg0: i32, %arg1: i32) -> (i32, i32) {
    %c0_i32 = arith.constant 0 : i32
    %c0_i32_0 = arith.constant 0 : i32
    return %arg0, %c0_i32 : i32, i32
  }
}

</mosaic_0001>

<llo_original>
// kernel: tpu_custom_call.1
$region0: #{tpu_custom_call.1}
  #allocation0 [shape = 'u32[]', space=smem, size = 0x4, offset = 0x4, fixed_abs, tag = 'smem constant byte address 0x4 - core index']
  #allocation1 [shape = 'u32[72,128]{1,0:T(1,128)}', space=vmem, size = 0x9000, scoped, tag = 'internal scratch']
  %s0 = inlined_call_operand.vmem [shape: f32[128,128], index: 0, kind: input, shape index: {}]
  %s1 = inlined_call_operand.hbm [shape: f32[128,128], index: 1, kind: input, shape index: {}]
  %s2 = inlined_call_operand.vmem [shape: f32[128,1], index: 2, kind: input, shape index: {}]
  %s3 = inlined_call_operand.vmem [shape: f32[1,128], index: 3, kind: input, shape index: {}]
  %s4 = inlined_call_operand.vmem [shape: f32[128,1], index: 4, kind: output, shape index: {}]
  %s5 = sld [smem:[#allocation0]]
  $region34: #{tpu_custom_call.1} parent=0
    _
  %s7 = ssub.s32 1, %s5
  %s8 = scalar_select 0, %s7, %s5
  $region1: #{tpu_custom_call.1} parent=0
    #allocation2 [shape = 'u8[65536]{0}', space=vmem, size = 0x10000, scoped, tag = 'input window, operand 1, single buffered']
    #allocation3 [shape = 's32[1]{0}', space=sflag, size = 0x4, scoped, tag = 'scoped memory for tpu_custom_call.1']
    %9 = vsyncpa [#allocation3], 0
    // Predicated region
    $region2: #{tpu_custom_call.1} parent=1 // pred_check
      _
    $region3: #{tpu_custom_call.1} parent=1 // pred_check_branch
      %11 = sbr.rel (0) target = $region5
    $region4: #{tpu_custom_call.1} parent=1 // pred_region
      _
    $region5: #{tpu_custom_call.1} parent=1 // pred_fallthru
      _
    // Predicated region
    $region6: #{tpu_custom_call.1} parent=1 // pred_check
      _
    $region7: #{tpu_custom_call.1} parent=1 // pred_check_branch
      %13 = sbr.rel (0) target = $region9
    $region8: #{tpu_custom_call.1} parent=1 // pred_region
      %15 = vsyncadd [#allocation3], 0
      %s16 = sshll.u32 %s1, 4
      %s17 = int_to_ptr.hbm [resolvable:$true] %s16
      %s18 = sshll.u32 [#allocation2], 4
      %s19 = int_to_ptr.vmem [resolvable:$true] %s18
      %24 = dma.hbm_to_vmem [thread:$0]  %s17, 2048, %s19, [#allocation3], 128, 128, 8
    $region9: #{tpu_custom_call.1} parent=1 // pred_fallthru
      _
    // Predicated region
    $region10: #{tpu_custom_call.1} parent=1 // pred_check
      _
    $region11: #{tpu_custom_call.1} parent=1 // pred_check_branch
      %26 = sbr.rel (0) target = $region13
    $region12: #{tpu_custom_call.1} parent=1 // pred_region
      _
    $region13: #{tpu_custom_call.1} parent=1 // pred_fallthru
      _
    // Predicated region
    $region14: #{tpu_custom_call.1} parent=1 // pred_check
      _
    $region15: #{tpu_custom_call.1} parent=1 // pred_check_branch
      %28 = sbr.rel (0) target = $region17
    $region16: #{tpu_custom_call.1} parent=1 // pred_region
      _
    $region17: #{tpu_custom_call.1} parent=1 // pred_fallthru
      _
    // Predicated region
    $region18: #{tpu_custom_call.1} parent=1 // pred_check
      _
    $region19: #{tpu_custom_call.1} parent=1 // pred_check_branch
      %30 = sbr.rel (0) target = $region21
    $region20: #{tpu_custom_call.1} parent=1 // pred_region
      %32 = dma.done [#allocation3], 2048
    $region21: #{tpu_custom_call.1} parent=1 // pred_fallthru
      _
    %p33 = scmp.eq.s32.totalorder 0, 0
    // Predicated region
    $region22: #{tpu_custom_call.1} parent=1 // pred_check
      %p34 = pneg %p33
    $region23: #{tpu_custom_call.1} parent=1 // pred_check_branch
      %36 = sbr.rel (%p34) target = $region25
    $region24: #{tpu_custom_call.1} parent=1 // pred_region
      %vm37 = vcmask 7168
      %38 = vst.msk [vmem:[%s4] sm:$0xff] %vm37, 0.0
      %39 = vst.msk [vmem:[%s4 + $0x8] sm:$0xff] %vm37, 0.0
      %40 = vst.msk [vmem:[%s4 + $0x10] sm:$0xff] %vm37, 0.0
      %41 = vst.msk [vmem:[%s4 + $0x18] sm:$0xff] %vm37, 0.0
      %42 = vst.msk [vmem:[%s4 + $0x20] sm:$0xff] %vm37, 0.0
      %43 = vst.msk [vmem:[%s4 + $0x28] sm:$0xff] %vm37, 0.0
      %44 = vst.msk [vmem:[%s4 + $0x30] sm:$0xff] %vm37, 0.0
      %45 = vst.msk [vmem:[%s4 + $0x38] sm:$0xff] %vm37, 0.0
      %46 = vst.msk [vmem:[%s4 + $0x40] sm:$0xff] %vm37, 0.0
      %47 = vst.msk [vmem:[%s4 + $0x48] sm:$0xff] %vm37, 0.0
      %48 = vst.msk [vmem:[%s4 + $0x50] sm:$0xff] %vm37, 0.0
      %49 = vst.msk [vmem:[%s4 + $0x58] sm:$0xff] %vm37, 0.0
      %50 = vst.msk [vmem:[%s4 + $0x60] sm:$0xff] %vm37, 0.0
      %51 = vst.msk [vmem:[%s4 + $0x68] sm:$0xff] %vm37, 0.0
      %52 = vst.msk [vmem:[%s4 + $0x70] sm:$0xff] %vm37, 0.0
      %53 = vst.msk [vmem:[%s4 + $0x78] sm:$0xff] %vm37, 0.0
    $region25: #{tpu_custom_call.1} parent=1 // pred_fallthru
      _
    %v54 = vld [vmem:[%s0] sm:$0xff]
    %v55 = vld [vmem:[%s0 + $0x8] sm:$0xff]
    %v56 = vld [vmem:[%s0 + $0x10] sm:$0xff]
    %v57 = vld [vmem:[%s0 + $0x18] sm:$0xff]
    %v58 = vld [vmem:[%s0 + $0x20] sm:$0xff]
    %v59 = vld [vmem:[%s0 + $0x28] sm:$0xff]
    %v60 = vld [vmem:[%s0 + $0x30] sm:$0xff]
    %v61 = vld [vmem:[%s0 + $0x38] sm:$0xff]
    %v62 = vld [vmem:[%s0 + $0x40] sm:$0xff]
    %v63 = vld [vmem:[%s0 + $0x48] sm:$0xff]
    %v64 = vld [vmem:[%s0 + $0x50] sm:$0xff]
    %v65 = vld [vmem:[%s0 + $0x58] sm:$0xff]
    %v66 = vld [vmem:[%s0 + $0x60] sm:$0xff]
    %v67 = vld [vmem:[%s0 + $0x68] sm:$0xff]
    %v68 = vld [vmem:[%s0 + $0x70] sm:$0xff]
    %v69 = vld [vmem:[%s0 + $0x78] sm:$0xff]
    %v70 = vld [vmem:[#allocation2] sm:$0xff]
    %v71 = vld [vmem:[#allocation2 + $0x8] sm:$0xff]
    %v72 = vld [vmem:[#allocation2 + $0x10] sm:$0xff]
    %v73 = vld [vmem:[#allocation2 + $0x18] sm:$0xff]
    %v74 = vld [vmem:[#allocation2 + $0x20] sm:$0xff]
    %v75 = vld [vmem:[#allocation2 + $0x28] sm:$0xff]
    %v76 = vld [vmem:[#allocation2 + $0x30] sm:$0xff]
    %v77 = vld [vmem:[#allocation2 + $0x38] sm:$0xff]
    %v78 = vld [vmem:[#allocation2 + $0x40] sm:$0xff]
    %v79 = vld [vmem:[#allocation2 + $0x48] sm:$0xff]
    %v80 = vld [vmem:[#allocation2 + $0x50] sm:$0xff]
    %v81 = vld [vmem:[#allocation2 + $0x58] sm:$0xff]
    %v82 = vld [vmem:[#allocation2 + $0x60] sm:$0xff]
    %v83 = vld [vmem:[#allocation2 + $0x68] sm:$0xff]
    %v84 = vld [vmem:[#allocation2 + $0x70] sm:$0xff]
    %v85 = vld [vmem:[#allocation2 + $0x78] sm:$0xff]
    %86 = vmatpush.xpose.msra.mxu0 %v85
    %87 = vmatpush.xpose.msra.mxu0 %v84
    %88 = vmatpush.xpose.msra.mxu0 %v83
    %89 = vmatpush.xpose.msra.mxu0 %v82
    %90 = vmatpush.xpose.msra.mxu0 %v81
    %91 = vmatpush.xpose.msra.mxu0 %v80
    %92 = vmatpush.xpose.msra.mxu0 %v79
    %93 = vmatpush.xpose.msra.mxu0 %v78
    %94 = vmatpush.xpose.msra.mxu0 %v77
    %95 = vmatpush.xpose.msra.mxu0 %v76
    %96 = vmatpush.xpose.msra.mxu0 %v75
    %97 = vmatpush.xpose.msra.mxu0 %v74
    %98 = vmatpush.xpose.msra.mxu0 %v73
    %99 = vmatpush.xpose.msra.mxu0 %v72
    %100 = vmatpush.xpose.msra.mxu0 %v71
    %101 = vmatpush.xpose.msra.mxu0 %v70
    %102 = vmatmul.f32.gmra.mxu0 %v54
    %v103 = vpop.f32.mrf.mxu0
    %v104 = vadd.f32 0.0, %v103
    %105 = vmatmul.f32.gmra.mxu0 %v55
    %v106 = vpop.f32.mrf.mxu0
    %v107 = vadd.f32 0.0, %v106
    %108 = vmatmul.f32.gmra.mxu0 %v56
    %v109 = vpop.f32.mrf.mxu0
    %v110 = vadd.f32 0.0, %v109
    %111 = vmatmul.f32.gmra.mxu0 %v57
    %v112 = vpop.f32.mrf.mxu0
    %v113 = vadd.f32 0.0, %v112
    %114 = vmatmul.f32.gmra.mxu0 %v58
    %v115 = vpop.f32.mrf.mxu0
    %v116 = vadd.f32 0.0, %v115
    %117 = vmatmul.f32.gmra.mxu0 %v59
    %v118 = vpop.f32.mrf.mxu0
    %v119 = vadd.f32 0.0, %v118
    %120 = vmatmul.f32.gmra.mxu0 %v60
    %v121 = vpop.f32.mrf.mxu0
    %v122 = vadd.f32 0.0, %v121
    %123 = vmatmul.f32.gmra.mxu0 %v61
    %v124 = vpop.f32.mrf.mxu0
    %v125 = vadd.f32 0.0, %v124
    %126 = vmatmul.f32.gmra.mxu0 %v62
    %v127 = vpop.f32.mrf.mxu0
    %v128 = vadd.f32 0.0, %v127
    %129 = vmatmul.f32.gmra.mxu0 %v63
    %v130 = vpop.f32.mrf.mxu0
    %v131 = vadd.f32 0.0, %v130
    %132 = vmatmul.f32.gmra.mxu0 %v64
    %v133 = vpop.f32.mrf.mxu0
    %v134 = vadd.f32 0.0, %v133
    %135 = vmatmul.f32.gmra.mxu0 %v65
    %v136 = vpop.f32.mrf.mxu0
    %v137 = vadd.f32 0.0, %v136
    %138 = vmatmul.f32.gmra.mxu0 %v66
    %v139 = vpop.f32.mrf.mxu0
    %v140 = vadd.f32 0.0, %v139
    %141 = vmatmul.f32.gmra.mxu0 %v67
    %v142 = vpop.f32.mrf.mxu0
    %v143 = vadd.f32 0.0, %v142
    %144 = vmatmul.f32.gmra.mxu0 %v68
    %v145 = vpop.f32.mrf.mxu0
    %v146 = vadd.f32 0.0, %v145
    %147 = vmatmul.f32.gmra.mxu0 %v69
    %v148 = vpop.f32.mrf.mxu0
    %v149 = vadd.f32 0.0, %v148
    %150 = vdwg.mxu0
    %s151 = smul.u32 0, 128
    %v152 = vlaneseq
    %v153 = vshrl.u32 %v152, 7
    %v154 = vadd.s32 %v153, 8
    %v155 = vadd.s32 %v153, 16
    %v156 = vadd.s32 %v153, 24
    %v157 = vadd.s32 %v153, 32
    %v158 = vadd.s32 %v153, 40
    %v159 = vadd.s32 %v153, 48
    %v160 = vadd.s32 %v153, 56
    %v161 = vadd.s32 %v153, 64
    %v162 = vadd.s32 %v153, 72
    %v163 = vadd.s32 %v153, 80
    %v164 = vadd.s32 %v153, 88
    %v165 = vadd.s32 %v153, 96
    %v166 = vadd.s32 %v153, 104
    %v167 = vadd.s32 %v153, 112
    %v168 = vadd.s32 %v153, 120
    %v169 = vstv %s151
    %v170 = vadd.s32 %v169, %v153
    %v171 = vadd.s32 %v169, %v154
    %v172 = vadd.s32 %v169, %v155
    %v173 = vadd.s32 %v169, %v156
    %v174 = vadd.s32 %v169, %v157
    %v175 = vadd.s32 %v169, %v158
    %v176 = vadd.s32 %v169, %v159
    %v177 = vadd.s32 %v169, %v160
    %v178 = vadd.s32 %v169, %v161
    %v179 = vadd.s32 %v169, %v162
    %v180 = vadd.s32 %v169, %v163
    %v181 = vadd.s32 %v169, %v164
    %v182 = vadd.s32 %v169, %v165
    %v183 = vadd.s32 %v169, %v166
    %v184 = vadd.s32 %v169, %v167
    %v185 = vadd.s32 %v169, %v168
    %s186 = smul.u32 0, 128
    %v187 = vlaneseq
    %v188 = vand.u32 %v187, 127
    %v189 = vstv %s186
    %v190 = vadd.s32 %v189, %v188
    %vm191 = vcmp.lt.s32.totalorder %v170, 8
    %vm192 = vcmp.lt.s32.totalorder %v171, 8
    %vm193 = vcmp.lt.s32.totalorder %v172, 8
    %vm194 = vcmp.lt.s32.totalorder %v173, 8
    %vm195 = vcmp.lt.s32.totalorder %v174, 8
    %vm196 = vcmp.lt.s32.totalorder %v175, 8
    %vm197 = vcmp.lt.s32.totalorder %v176, 8
    %vm198 = vcmp.lt.s32.totalorder %v177, 8
    %vm199 = vcmp.lt.s32.totalorder %v178, 8
    %vm200 = vcmp.lt.s32.totalorder %v179, 8
    %vm201 = vcmp.lt.s32.totalorder %v180, 8
    %vm202 = vcmp.lt.s32.totalorder %v181, 8
    %vm203 = vcmp.lt.s32.totalorder %v182, 8
    %vm204 = vcmp.lt.s32.totalorder %v183, 8
    %vm205 = vcmp.lt.s32.totalorder %v184, 8
    %vm206 = vcmp.lt.s32.totalorder %v185, 8
    %vm207 = vcmp.lt.s32.totalorder %v190, 8
    %v208 = vsel %vm191, 1, 0
    %v209 = vsel %vm192, 1, 0
    %v210 = vsel %vm193, 1, 0
    %v211 = vsel %vm194, 1, 0
    %v212 = vsel %vm195, 1, 0
    %v213 = vsel %vm196, 1, 0
    %v214 = vsel %vm197, 1, 0
    %v215 = vsel %vm198, 1, 0
    %v216 = vsel %vm199, 1, 0
    %v217 = vsel %vm200, 1, 0
    %v218 = vsel %vm201, 1, 0
    %v219 = vsel %vm202, 1, 0
    %v220 = vsel %vm203, 1, 0
    %v221 = vsel %vm204, 1, 0
    %v222 = vsel %vm205, 1, 0
    %v223 = vsel %vm206, 1, 0
    %vm224 = vcmp.eq.s32.totalorder %v208, 1
    %vm225 = vcmp.eq.s32.totalorder %v209, 1
    %vm226 = vcmp.eq.s32.totalorder %v210, 1
    %vm227 = vcmp.eq.s32.totalorder %v211, 1
    %vm228 = vcmp.eq.s32.totalorder %v212, 1
    %vm229 = vcmp.eq.s32.totalorder %v213, 1
    %vm230 = vcmp.eq.s32.totalorder %v214, 1
    %vm231 = vcmp.eq.s32.totalorder %v215, 1
    %vm232 = vcmp.eq.s32.totalorder %v216, 1
    %vm233 = vcmp.eq.s32.totalorder %v217, 1
    %vm234 = vcmp.eq.s32.totalorder %v218, 1
    %vm235 = vcmp.eq.s32.totalorder %v219, 1
    %vm236 = vcmp.eq.s32.totalorder %v220, 1
    %vm237 = vcmp.eq.s32.totalorder %v221, 1
    %vm238 = vcmp.eq.s32.totalorder %v222, 1
    %vm239 = vcmp.eq.s32.totalorder %v223, 1
    %v240 = vsel %vm207, 1, 0
    %vm241 = vcmp.eq.s32.totalorder %v240, 1
    %vm242 = vmand %vm224, %vm241
    %vm243 = vmand %vm225, %vm241
    %vm244 = vmand %vm226, %vm241
    %vm245 = vmand %vm227, %vm241
    %vm246 = vmand %vm228, %vm241
    %vm247 = vmand %vm229, %vm241
    %vm248 = vmand %vm230, %vm241
    %vm249 = vmand %vm231, %vm241
    %vm250 = vmand %vm232, %vm241
    %vm251 = vmand %vm233, %vm241
    %vm252 = vmand %vm234, %vm241
    %vm253 = vmand %vm235, %vm241
    %vm254 = vmand %vm236, %vm241
    %vm255 = vmand %vm237, %vm241
    %vm256 = vmand %vm238, %vm241
    %vm257 = vmand %vm239, %vm241
    %v258 = vsel %vm242, %v104, -1e+30
    %v259 = vsel %vm243, %v107, -1e+30
    %v260 = vsel %vm244, %v110, -1e+30
    %v261 = vsel %vm245, %v113, -1e+30
    %v262 = vsel %vm246, %v116, -1e+30
    %v263 = vsel %vm247, %v119, -1e+30
    %v264 = vsel %vm248, %v122, -1e+30
    %v265 = vsel %vm249, %v125, -1e+30
    %v266 = vsel %vm250, %v128, -1e+30
    %v267 = vsel %vm251, %v131, -1e+30
    %v268 = vsel %vm252, %v134, -1e+30
    %v269 = vsel %vm253, %v137, -1e+30
    %v270 = vsel %vm254, %v140, -1e+30
    %v271 = vsel %vm255, %v143, -1e+30
    %v272 = vsel %vm256, %v146, -1e+30
    %v273 = vsel %vm257, %v149, -1e+30
    %v274 = vld [vmem:[%s2] sm:$0xff]
    %v275 = vld [vmem:[%s2 + $0x8] sm:$0xff]
    %v276 = vld [vmem:[%s2 + $0x10] sm:$0xff]
    %v277 = vld [vmem:[%s2 + $0x18] sm:$0xff]
    %v278 = vld [vmem:[%s2 + $0x20] sm:$0xff]
    %v279 = vld [vmem:[%s2 + $0x28] sm:$0xff]
    %v280 = vld [vmem:[%s2 + $0x30] sm:$0xff]
    %v281 = vld [vmem:[%s2 + $0x38] sm:$0xff]
    %v282 = vld [vmem:[%s2 + $0x40] sm:$0xff]
    %v283 = vld [vmem:[%s2 + $0x48] sm:$0xff]
    %v284 = vld [vmem:[%s2 + $0x50] sm:$0xff]
    %v285 = vld [vmem:[%s2 + $0x58] sm:$0xff]
    %v286 = vld [vmem:[%s2 + $0x60] sm:$0xff]
    %v287 = vld [vmem:[%s2 + $0x68] sm:$0xff]
    %v288 = vld [vmem:[%s2 + $0x70] sm:$0xff]
    %v289 = vld [vmem:[%s2 + $0x78] sm:$0xff]
    %v290 = vld [vmem:[%s3] sm:$0x1]
    %v291 = vadd.f32 %v258, 0.0
    %v292 = vadd.f32 %v259, 0.0
    %v293 = vadd.f32 %v260, 0.0
    %v294 = vadd.f32 %v261, 0.0
    %v295 = vadd.f32 %v262, 0.0
    %v296 = vadd.f32 %v263, 0.0
    %v297 = vadd.f32 %v264, 0.0
    %v298 = vadd.f32 %v265, 0.0
    %v299 = vadd.f32 %v266, 0.0
    %v300 = vadd.f32 %v267, 0.0
    %v301 = vadd.f32 %v268, 0.0
    %v302 = vadd.f32 %v269, 0.0
    %v303 = vadd.f32 %v270, 0.0
    %v304 = vadd.f32 %v271, 0.0
    %v305 = vadd.f32 %v272, 0.0
    %v306 = vadd.f32 %v273, 0.0
    %308 = vset.pattern.permute.xlu0 0
    %309 = vperm.xlu0 %308, %v274
    %v310 = vpop.permute.xlu0 %309
    %313 = vset.pattern.permute.xlu0 0
    %314 = vperm.xlu0 %313, %v275
    %v315 = vpop.permute.xlu0 %314
    %318 = vset.pattern.permute.xlu0 0
    %319 = vperm.xlu0 %318, %v276
    %v320 = vpop.permute.xlu0 %319
    %323 = vset.pattern.permute.xlu0 0
    %324 = vperm.xlu0 %323, %v277
    %v325 = vpop.permute.xlu0 %324
    %328 = vset.pattern.permute.xlu0 0
    %329 = vperm.xlu0 %328, %v278
    %v330 = vpop.permute.xlu0 %329
    %333 = vset.pattern.permute.xlu0 0
    %334 = vperm.xlu0 %333, %v279
    %v335 = vpop.permute.xlu0 %334
    %338 = vset.pattern.permute.xlu0 0
    %339 = vperm.xlu0 %338, %v280
    %v340 = vpop.permute.xlu0 %339
    %343 = vset.pattern.permute.xlu0 0
    %344 = vperm.xlu0 %343, %v281
    %v345 = vpop.permute.xlu0 %344
    %348 = vset.pattern.permute.xlu0 0
    %349 = vperm.xlu0 %348, %v282
    %v350 = vpop.permute.xlu0 %349
    %353 = vset.pattern.permute.xlu0 0
    %354 = vperm.xlu0 %353, %v283
    %v355 = vpop.permute.xlu0 %354
    %358 = vset.pattern.permute.xlu0 0
    %359 = vperm.xlu0 %358, %v284
    %v360 = vpop.permute.xlu0 %359
    %363 = vset.pattern.permute.xlu0 0
    %364 = vperm.xlu0 %363, %v285
    %v365 = vpop.permute.xlu0 %364
    %368 = vset.pattern.permute.xlu0 0
    %369 = vperm.xlu0 %368, %v286
    %v370 = vpop.permute.xlu0 %369
    %373 = vset.pattern.permute.xlu0 0
    %374 = vperm.xlu0 %373, %v287
    %v375 = vpop.permute.xlu0 %374
    %378 = vset.pattern.permute.xlu0 0
    %379 = vperm.xlu0 %378, %v288
    %v380 = vpop.permute.xlu0 %379
    %383 = vset.pattern.permute.xlu0 0
    %384 = vperm.xlu0 %383, %v289
    %v385 = vpop.permute.xlu0 %384
    %v387 = vsub.f32 %v291, %v310
    %v388 = vsub.f32 %v292, %v315
    %v389 = vsub.f32 %v293, %v320
    %v390 = vsub.f32 %v294, %v325
    %v391 = vsub.f32 %v295, %v330
    %v392 = vsub.f32 %v296, %v335
    %v393 = vsub.f32 %v297, %v340
    %v394 = vsub.f32 %v298, %v345
    %v395 = vsub.f32 %v299, %v350
    %v396 = vsub.f32 %v300, %v355
    %v397 = vsub.f32 %v301, %v360
    %v398 = vsub.f32 %v302, %v365
    %v399 = vsub.f32 %v303, %v370
    %v400 = vsub.f32 %v304, %v375
    %v401 = vsub.f32 %v305, %v380
    %v402 = vsub.f32 %v306, %v385
    %v403 = vmax.f32 %v387, 0.0
    %v404 = vmax.f32 %v388, 0.0
    %v405 = vmax.f32 %v389, 0.0
    %v406 = vmax.f32 %v390, 0.0
    %v407 = vmax.f32 %v391, 0.0
    %v408 = vmax.f32 %v392, 0.0
    %v409 = vmax.f32 %v393, 0.0
    %v410 = vmax.f32 %v394, 0.0
    %v411 = vmax.f32 %v395, 0.0
    %v412 = vmax.f32 %v396, 0.0
    %v413 = vmax.f32 %v397, 0.0
    %v414 = vmax.f32 %v398, 0.0
    %v415 = vmax.f32 %v399, 0.0
    %v416 = vmax.f32 %v400, 0.0
    %v417 = vmax.f32 %v401, 0.0
    %v418 = vmax.f32 %v402, 0.0
    %v420 = vperm.slane %v290, 0
    %v422 = vsub.f32 %v291, %v420
    %v423 = vsub.f32 %v292, %v420
    %v424 = vsub.f32 %v293, %v420
    %v425 = vsub.f32 %v294, %v420
    %v426 = vsub.f32 %v295, %v420
    %v427 = vsub.f32 %v296, %v420
    %v428 = vsub.f32 %v297, %v420
    %v429 = vsub.f32 %v298, %v420
    %v430 = vsub.f32 %v299, %v420
    %v431 = vsub.f32 %v300, %v420
    %v432 = vsub.f32 %v301, %v420
    %v433 = vsub.f32 %v302, %v420
    %v434 = vsub.f32 %v303, %v420
    %v435 = vsub.f32 %v304, %v420
    %v436 = vsub.f32 %v305, %v420
    %v437 = vsub.f32 %v306, %v420
    %v438 = vmax.f32 %v422, 0.0
    %v439 = vmax.f32 %v423, 0.0
    %v440 = vmax.f32 %v424, 0.0
    %v441 = vmax.f32 %v425, 0.0
    %v442 = vmax.f32 %v426, 0.0
    %v443 = vmax.f32 %v427, 0.0
    %v444 = vmax.f32 %v428, 0.0
    %v445 = vmax.f32 %v429, 0.0
    %v446 = vmax.f32 %v430, 0.0
    %v447 = vmax.f32 %v431, 0.0
    %v448 = vmax.f32 %v432, 0.0
    %v449 = vmax.f32 %v433, 0.0
    %v450 = vmax.f32 %v434, 0.0
    %v451 = vmax.f32 %v435, 0.0
    %v452 = vmax.f32 %v436, 0.0
    %v453 = vmax.f32 %v437, 0.0
    %v454 = vadd.f32 %v403, %v438
    %v455 = vadd.f32 %v404, %v439
    %v456 = vadd.f32 %v405, %v440
    %v457 = vadd.f32 %v406, %v441
    %v458 = vadd.f32 %v407, %v442
    %v459 = vadd.f32 %v408, %v443
    %v460 = vadd.f32 %v409, %v444
    %v461 = vadd.f32 %v410, %v445
    %v462 = vadd.f32 %v411, %v446
    %v463 = vadd.f32 %v412, %v447
    %v464 = vadd.f32 %v413, %v448
    %v465 = vadd.f32 %v414, %v449
    %v466 = vadd.f32 %v415, %v450
    %v467 = vadd.f32 %v416, %v451
    %v468 = vadd.f32 %v417, %v452
    %v469 = vadd.f32 %v418, %v453
    %v470 = vld [vmem:[%s4] sm:$0xff]
    %v471 = vld [vmem:[%s4 + $0x8] sm:$0xff]
    %v472 = vld [vmem:[%s4 + $0x10] sm:$0xff]
    %v473 = vld [vmem:[%s4 + $0x18] sm:$0xff]
    %v474 = vld [vmem:[%s4 + $0x20] sm:$0xff]
    %v475 = vld [vmem:[%s4 + $0x28] sm:$0xff]
    %v476 = vld [vmem:[%s4 + $0x30] sm:$0xff]
    %v477 = vld [vmem:[%s4 + $0x38] sm:$0xff]
    %v478 = vld [vmem:[%s4 + $0x40] sm:$0xff]
    %v479 = vld [vmem:[%s4 + $0x48] sm:$0xff]
    %v480 = vld [vmem:[%s4 + $0x50] sm:$0xff]
    %v481 = vld [vmem:[%s4 + $0x58] sm:$0xff]
    %v482 = vld [vmem:[%s4 + $0x60] sm:$0xff]
    %v483 = vld [vmem:[%s4 + $0x68] sm:$0xff]
    %v484 = vld [vmem:[%s4 + $0x70] sm:$0xff]
    %v485 = vld [vmem:[%s4 + $0x78] sm:$0xff]
    %486 = vadd.xlane.f32.xlu0 %v454
    %v487 = vpop.xlane.xlu0 %486
    %488 = vadd.xlane.f32.xlu0 %v455
    %v489 = vpop.xlane.xlu0 %488
    %490 = vadd.xlane.f32.xlu0 %v456
    %v491 = vpop.xlane.xlu0 %490
    %492 = vadd.xlane.f32.xlu0 %v457
    %v493 = vpop.xlane.xlu0 %492
    %494 = vadd.xlane.f32.xlu0 %v458
    %v495 = vpop.xlane.xlu0 %494
    %496 = vadd.xlane.f32.xlu0 %v459
    %v497 = vpop.xlane.xlu0 %496
    %498 = vadd.xlane.f32.xlu0 %v460
    %v499 = vpop.xlane.xlu0 %498
    %500 = vadd.xlane.f32.xlu0 %v461
    %v501 = vpop.xlane.xlu0 %500
    %502 = vadd.xlane.f32.xlu0 %v462
    %v503 = vpop.xlane.xlu0 %502
    %504 = vadd.xlane.f32.xlu0 %v463
    %v505 = vpop.xlane.xlu0 %504
    %506 = vadd.xlane.f32.xlu0 %v464
    %v507 = vpop.xlane.xlu0 %506
    %508 = vadd.xlane.f32.xlu0 %v465
    %v509 = vpop.xlane.xlu0 %508
    %510 = vadd.xlane.f32.xlu0 %v466
    %v511 = vpop.xlane.xlu0 %510
    %512 = vadd.xlane.f32.xlu0 %v467
    %v513 = vpop.xlane.xlu0 %512
    %514 = vadd.xlane.f32.xlu0 %v468
    %v515 = vpop.xlane.xlu0 %514
    %516 = vadd.xlane.f32.xlu0 %v469
    %v517 = vpop.xlane.xlu0 %516
    %v518 = vadd.f32 %v470, %v487
    %v519 = vadd.f32 %v471, %v489
    %v520 = vadd.f32 %v472, %v491
    %v521 = vadd.f32 %v473, %v493
    %v522 = vadd.f32 %v474, %v495
    %v523 = vadd.f32 %v475, %v497
    %v524 = vadd.f32 %v476, %v499
    %v525 = vadd.f32 %v477, %v501
    %v526 = vadd.f32 %v478, %v503
    %v527 = vadd.f32 %v479, %v505
    %v528 = vadd.f32 %v480, %v507
    %v529 = vadd.f32 %v481, %v509
    %v530 = vadd.f32 %v482, %v511
    %v531 = vadd.f32 %v483, %v513
    %v532 = vadd.f32 %v484, %v515
    %v533 = vadd.f32 %v485, %v517
    %vm534 = vcmask 7168
    %535 = vst.msk [vmem:[%s4] sm:$0xff] %vm534, %v518
    %536 = vst.msk [vmem:[%s4 + $0x8] sm:$0xff] %vm534, %v519
    %537 = vst.msk [vmem:[%s4 + $0x10] sm:$0xff] %vm534, %v520
    %538 = vst.msk [vmem:[%s4 + $0x18] sm:$0xff] %vm534, %v521
    %539 = vst.msk [vmem:[%s4 + $0x20] sm:$0xff] %vm534, %v522
    %540 = vst.msk [vmem:[%s4 + $0x28] sm:$0xff] %vm534, %v523
    %541 = vst.msk [vmem:[%s4 + $0x30] sm:$0xff] %vm534, %v524
    %542 = vst.msk [vmem:[%s4 + $0x38] sm:$0xff] %vm534, %v525
    %543 = vst.msk [vmem:[%s4 + $0x40] sm:$0xff] %vm534, %v526
    %544 = vst.msk [vmem:[%s4 + $0x48] sm:$0xff] %vm534, %v527
    %545 = vst.msk [vmem:[%s4 + $0x50] sm:$0xff] %vm534, %v528
    %546 = vst.msk [vmem:[%s4 + $0x58] sm:$0xff] %vm534, %v529
    %547 = vst.msk [vmem:[%s4 + $0x60] sm:$0xff] %vm534, %v530
    %548 = vst.msk [vmem:[%s4 + $0x68] sm:$0xff] %vm534, %v531
    %549 = vst.msk [vmem:[%s4 + $0x70] sm:$0xff] %vm534, %v532
    %550 = vst.msk [vmem:[%s4 + $0x78] sm:$0xff] %vm534, %v533
    // Predicated region
    $region26: #{tpu_custom_call.1} parent=1 // pred_check
      _
    $region27: #{tpu_custom_call.1} parent=1 // pred_check_branch
      %552 = sbr.rel (0) target = $region29
    $region28: #{tpu_custom_call.1} parent=1 // pred_region
      _
    $region29: #{tpu_custom_call.1} parent=1 // pred_fallthru
      _
    // Predicated region
    $region30: #{tpu_custom_call.1} parent=1 // pred_check
      _
    $region31: #{tpu_custom_call.1} parent=1 // pred_check_branch
      %554 = sbr.rel (0) target = $region33
    $region32: #{tpu_custom_call.1} parent=1 // pred_region
      _
    $region33: #{tpu_custom_call.1} parent=1 // pred_fallthru
      _
    %555 = vsyncpa [#allocation3], 1

</llo_original>
